<compile_context>
chip_gen: v7x
topology: tpu7x:2x2x1
jax: 0.10.0
libtpu: 0.0.40
codegen_flags: <defaults>
</compile_context>

<pallas_src>
import math
import functools

import numpy as np
import jax
import jax.numpy as jnp
from jax import lax
from jax.experimental import pallas as pl
from jax.experimental.pallas import tpu as pltpu


# ----------------------------------------------------------------------------
# Kernel 1: fused QKV projection (single matmul) + RoPE, head-major outputs.
# ----------------------------------------------------------------------------
def _qkv_rope_kernel(x_ref, w_ref, cos_ref, sin_ref, q_ref, k_ref, v_ref,
                     *, n_heads, n_kv_heads, head_dim):
    half = head_dim // 2
    wq_cols = n_heads * head_dim
    wk_cols = n_kv_heads * head_dim

    x = x_ref[...]                                              # (tS, dim) bf16
    qkv = jnp.dot(x, w_ref[...], preferred_element_type=jnp.float32)

    cos = cos_ref[...]                                          # (tS, Dh/2) f32
    sin = sin_ref[...]

    # Q heads: rotary applied in the de-interleaved [re | im] per-head layout
    # (weight columns were permuted in the wrapper; 1/sqrt(Dh) folded into wq).
    # Halves are stored directly — no full-width concatenated temporary.
    for h in range(n_heads):
        a = qkv[:, h * head_dim: h * head_dim + half]
        b = qkv[:, h * head_dim + half: (h + 1) * head_dim]
        q_ref[h, :, :half] = (a * cos - b * sin).astype(q_ref.dtype)
        q_ref[h, :, half:] = (a * sin + b * cos).astype(q_ref.dtype)

    # K heads (rotary) and V heads (copy; V keeps the original column order,
    # so no permutation of wo is needed downstream).
    for g in range(n_kv_heads):
        kb = wq_cols + g * head_dim
        a = qkv[:, kb: kb + half]
        b = qkv[:, kb + half: kb + head_dim]
        k_ref[g, :, :half] = (a * cos - b * sin).astype(k_ref.dtype)
        k_ref[g, :, half:] = (a * sin + b * cos).astype(k_ref.dtype)

        vb = wq_cols + wk_cols + g * head_dim
        v_ref[g, :, :] = qkv[:, vb: vb + head_dim].astype(v_ref.dtype)


# ----------------------------------------------------------------------------
# Kernel 2: flash-style causal attention with online softmax (GQA).
# ----------------------------------------------------------------------------
def _flash_attn_kernel(q_ref, k_ref, v_ref, o_ref, m_sc, l_sc, acc_sc,
                       *, n_rep, tq, tkv, head_dim):
    qi = pl.program_id(2)
    kj = pl.program_id(3)
    # Last kv tile that intersects the causal region of this q tile.
    last_kv = ((qi + 1) * tq - 1) // tkv

    @pl.when(kj == 0)
    def _init():
        m_sc[...] = jnp.full(m_sc.shape, -jnp.inf, dtype=m_sc.dtype)
        l_sc[...] = jnp.zeros(l_sc.shape, dtype=l_sc.dtype)
        acc_sc[...] = jnp.zeros(acc_sc.shape, dtype=acc_sc.dtype)

    def _update(apply_mask):
        k = k_ref[...]                                          # (tkv, Dh)
        v = v_ref[...]                                          # (tkv, Dh)
        if apply_mask:
            row = lax.broadcasted_iota(jnp.int32, (tq, tkv), 0)
            col = lax.broadcasted_iota(jnp.int32, (tq, tkv), 1)
            bias = jnp.where(kj * tkv + col > qi * tq + row,
                             -jnp.inf, 0.0).astype(jnp.float32)
        for r in range(n_rep):                                  # GQA: loop group heads
            q_r = q_ref[r]                                      # (tq, Dh)
            s = lax.dot_general(q_r, k, (((1,), (1,)), ((), ())),
                                preferred_element_type=jnp.float32)  # (tq, tkv)
            if apply_mask:
                s = s + bias
            m_prev = m_sc[r]
            m_new = jnp.maximum(m_prev, jnp.max(s, axis=-1, keepdims=True))
            alpha = jnp.exp(m_prev - m_new)
            p = jnp.exp(s - m_new)
            l_sc[r] = alpha * l_sc[r] + jnp.sum(p, axis=-1, keepdims=True)
            acc_sc[r] = alpha * acc_sc[r] + jnp.dot(
                p.astype(v.dtype), v, preferred_element_type=jnp.float32)
            m_sc[r] = m_new

    # Tiles strictly below the diagonal: no mask work at all.
    @pl.when((kj + 1) * tkv - 1 <= qi * tq)
    def _no_mask():
        _update(False)

    # Tiles straddling the diagonal (and still needed): apply the mask.
    @pl.when(jnp.logical_and(kj * tkv < (qi + 1) * tq,
                             (kj + 1) * tkv - 1 > qi * tq))
    def _with_mask():
        _update(True)

    # Finalize on the last *needed* kv tile (later tiles are fully masked and
    # their K/V DMAs are deduped away by the clamped index_map).
    @pl.when(kj == last_kv)
    def _finalize():
        for r in range(n_rep):
            inv_l = pl.reciprocal(l_sc[r], approx=True)         # deferred normalization
            o_ref[r] = (acc_sc[r] * inv_l).astype(o_ref.dtype)


# ----------------------------------------------------------------------------
# Kernel 3: output projection, head axis as the contraction (reduction) grid dim.
# ----------------------------------------------------------------------------
def _out_proj_kernel(a_ref, wo_ref, o_ref, acc_ref):
    h = pl.program_id(2)

    @pl.when(h == 0)
    def _init():
        acc_ref[...] = jnp.zeros(acc_ref.shape, dtype=acc_ref.dtype)

    acc_ref[...] += jnp.dot(a_ref[...], wo_ref[...],
                            preferred_element_type=jnp.float32)

    @pl.when(h == pl.num_programs(2) - 1)
    def _finalize():
        o_ref[...] = acc_ref[...].astype(o_ref.dtype)


def _deinterleave_cols(n_h, dh):
    """Old column index for each new column of the per-head [re|im] layout."""
    half = dh // 2
    idx = np.arange(n_h * dh)
    h = idx // dh
    p = idx % dh
    imag = (p >= half).astype(np.int64)
    pos = np.where(imag == 1, p - half, p)
    return h * dh + 2 * pos + imag


def attention_pallas(x, wq, wk, wv, wo, *, n_heads, n_kv_heads, head_dim,
                     theta=10000.0):
    B, S, dim = x.shape
    assert n_heads % n_kv_heads == 0
    n_rep = n_heads // n_kv_heads
    Dh = head_dim
    half = Dh // 2
    Wq = n_heads * Dh
    Wk = n_kv_heads * Dh
    Wtot = Wq + 2 * Wk
    scale = 1.0 / math.sqrt(Dh)

    # Small RoPE tables (S, Dh/2) only; broadcast across heads inside kernel 1.
    freqs = 1.0 / (theta ** (np.arange(0, Dh, 2)[:half].astype(np.float32) / Dh))
    ang = np.outer(np.arange(S, dtype=np.float32), freqs)       # (S, Dh/2)
    cos = jnp.asarray(np.cos(ang), dtype=jnp.float32)
    sin = jnp.asarray(np.sin(ang), dtype=jnp.float32)

    # bf16 weights; Q/K columns permuted to the per-head [re|im] layout so RoPE
    # is pure VPU work and scores stay exact (shared per-head permutation).
    # Softmax 1/sqrt(Dh) folded into wq (linear, zero kernel cost).
    wq_p = (jnp.asarray(wq)[:, _deinterleave_cols(n_heads, Dh)] * scale
            ).astype(jnp.bfloat16)
    wk_p = jnp.asarray(wk)[:, _deinterleave_cols(n_kv_heads, Dh)].astype(jnp.bfloat16)
    wv_b = jnp.asarray(wv).astype(jnp.bfloat16)
    w_all = jnp.concatenate([wq_p, wk_p, wv_b], axis=1)         # (dim, Wq+2*Wk)
    wo_h = jnp.asarray(wo).astype(jnp.bfloat16).reshape(n_heads, Dh, dim)

    x_bf = x.astype(jnp.bfloat16)                               # halve HBM read bytes

    vmem_cp = dict(vmem_limit_bytes=32 * 1024 * 1024)

    # ---- 1) fused QKV projection + RoPE -------------------------------------
    tS1 = min(S, 512)
    assert S % tS1 == 0
    qkv_kernel = functools.partial(_qkv_rope_kernel, n_heads=n_heads,
                                   n_kv_heads=n_kv_heads, head_dim=Dh)
    q4, k4, v4 = pl.pallas_call(
        qkv_kernel,
        out_shape=(jax.ShapeDtypeStruct((B, n_heads, S, Dh), jnp.bfloat16),
                   jax.ShapeDtypeStruct((B, n_kv_heads, S, Dh), jnp.bfloat16),
                   jax.ShapeDtypeStruct((B, n_kv_heads, S, Dh), jnp.bfloat16)),
        grid_spec=pltpu.PrefetchScalarGridSpec(
            num_scalar_prefetch=0,
            grid=(B, S // tS1),
            in_specs=[
                pl.BlockSpec((pl.Squeezed(), tS1, dim), lambda b, i: (b, i, 0)),
                pl.BlockSpec((dim, Wtot), lambda b, i: (0, 0)),
                pl.BlockSpec((tS1, half), lambda b, i: (i, 0)),
                pl.BlockSpec((tS1, half), lambda b, i: (i, 0)),
            ],
            out_specs=[
                pl.BlockSpec((pl.Squeezed(), n_heads, tS1, Dh),
                             lambda b, i: (b, 0, i, 0)),
                pl.BlockSpec((pl.Squeezed(), n_kv_heads, tS1, Dh),
                             lambda b, i: (b, 0, i, 0)),
                pl.BlockSpec((pl.Squeezed(), n_kv_heads, tS1, Dh),
                             lambda b, i: (b, 0, i, 0)),
            ]),
        compiler_params=pltpu.CompilerParams(
            dimension_semantics=("parallel", "parallel"), **vmem_cp),
    )(x_bf, w_all, cos, sin)
    # TODO(synk): for large `dim`, add an "arbitrary" contraction-axis grid dim
    # over `dim` (fp32 accumulator + pl.when init/finalize) and tile Wtot so the
    # weight blocks fit v7x's 64 MiB VMEM.

    # ---- 2) flash attention --------------------------------------------------
    tq = min(S, 128)
    tkv = min(S, 256)   # 256-wide MXU on v6e/v7x; TODO(synk): prefer tkv=128 on v5e.
    assert S % tq == 0 and S % tkv == 0
    n_q_tiles = S // tq
    n_kv_tiles = S // tkv

    flash = functools.partial(_flash_attn_kernel, n_rep=n_rep, tq=tq, tkv=tkv,
                              head_dim=Dh)
    cost = pl.CostEstimate(                                     # causal ~halves work
        flops=int(2 * B * n_heads * S * S * Dh),
        transcendentals=int(B * n_heads * S * S // 2),
        bytes_accessed=int(2 * (2 * q4.size + k4.size + v4.size)))

    # Clamp the kv block index so tiles above the causal diagonal repeat the
    # last needed tile -> the DMA is deduped (no wasted K/V HBM traffic).
    kv_idx = lambda b, g, i, j: (b, g, jnp.minimum(j, ((i + 1) * tq - 1) // tkv), 0)

    attn = pl.pallas_call(
        flash,
        out_shape=jax.ShapeDtypeStruct((B, n_heads, S, Dh), jnp.bfloat16),
        grid_spec=pltpu.PrefetchScalarGridSpec(
            num_scalar_prefetch=0,
            grid=(B, n_kv_heads, n_q_tiles, n_kv_tiles),
            in_specs=[
                pl.BlockSpec((pl.Squeezed(), n_rep, tq, Dh),
                             lambda b, g, i, j: (b, g, i, 0)),
                pl.BlockSpec((pl.Squeezed(), pl.Squeezed(), tkv, Dh), kv_idx),
                pl.BlockSpec((pl.Squeezed(), pl.Squeezed(), tkv, Dh), kv_idx),
            ],
            out_specs=pl.BlockSpec((pl.Squeezed(), n_rep, tq, Dh),
                                   lambda b, g, i, j: (b, g, i, 0)),
            scratch_shapes=[pltpu.VMEM((n_rep, tq, 1), jnp.float32),   # m
                            pltpu.VMEM((n_rep, tq, 1), jnp.float32),   # l
                            pltpu.VMEM((n_rep, tq, Dh), jnp.float32)]),  # acc
        compiler_params=pltpu.CompilerParams(
            dimension_semantics=("parallel", "parallel", "parallel", "arbitrary"),
            **vmem_cp),
        cost_estimate=cost,
    )(q4, k4, v4)
    # TODO(synk): optionally fuse (q_tile, kv_tile) into one triangular 1-D grid
    # via scalar-prefetched schedule arrays to also skip the grid-step overhead
    # of fully-masked tiles.

    # ---- 3) output projection (head axis = contraction grid dim) ------------
    tS3 = min(S, 512)
    assert S % tS3 == 0
    out = pl.pallas_call(
        _out_proj_kernel,
        out_shape=jax.ShapeDtypeStruct((B, S, dim), jnp.float32),
        grid_spec=pltpu.PrefetchScalarGridSpec(
            num_scalar_prefetch=0,
            grid=(B, S // tS3, n_heads),
            in_specs=[
                pl.BlockSpec((pl.Squeezed(), pl.Squeezed(), tS3, Dh),
                             lambda b, i, h: (b, h, i, 0)),
                pl.BlockSpec((pl.Squeezed(), Dh, dim), lambda b, i, h: (h, 0, 0)),
            ],
            out_specs=pl.BlockSpec((pl.Squeezed(), tS3, dim),
                                   lambda b, i, h: (b, i, 0)),
            scratch_shapes=[pltpu.VMEM((tS3, dim), jnp.float32)]),
        compiler_params=pltpu.CompilerParams(
            dimension_semantics=("parallel", "parallel", "arbitrary"), **vmem_cp),
    )(attn, wo_h)

    return out


def attention_reference(x, wq, wk, wv, wo, *, n_heads, n_kv_heads, head_dim):
    """Pure-JAX fp32 mirror of the PyTorch forward (training branch)."""
    B, S, dim = x.shape
    n_rep = n_heads // n_kv_heads
    xq = (x @ wq).reshape(B, S, n_heads, head_dim)
    xk = (x @ wk).reshape(B, S, n_kv_heads, head_dim)
    xv = (x @ wv).reshape(B, S, n_kv_heads, head_dim)

    freqs = 1.0 / (10000.0 ** (np.arange(0, head_dim, 2)[: head_dim // 2]
                               .astype(np.float32) / head_dim))
    ang = np.outer(np.arange(S, dtype=np.float32), freqs)
    cos = jnp.asarray(np.cos(ang)); sin = jnp.asarray(np.sin(ang))

    def rope(v):
        vr = v.reshape(*v.shape[:-1], head_dim // 2, 2)
        a, b = vr[..., 0], vr[..., 1]
        c = cos[None, :, None, :]; s = sin[None, :, None, :]
        return jnp.stack([a * c - b * s, a * s + b * c], axis=-1).reshape(v.shape)

    xq, xk = rope(xq), rope(xk)
    keys = jnp.repeat(xk, n_rep, axis=2)
    values = jnp.repeat(xv, n_rep, axis=2)

    xq = xq.transpose(0, 2, 1, 3)
    keys = keys.transpose(0, 2, 1, 3)
    values = values.transpose(0, 2, 1, 3)
    scores = jnp.einsum("bhqd,bhkd->bhqk", xq, keys) / math.sqrt(head_dim)
    mask = jnp.triu(jnp.full((S, S), -jnp.inf, dtype=jnp.float32), k=1)
    scores = jax.nn.softmax(scores + mask, axis=-1)
    out = jnp.einsum("bhqk,bhkd->bhqd", scores, values)
    out = out.transpose(0, 2, 1, 3).reshape(B, S, -1)
    return out @ wo


if __name__ == "__main__":
    # ModelArgs-equivalent small config (training branch: inference=False).
    # TODO(synk): inference/KV-cache branch (start_pos > 0, cache updates) is
    # not implemented; only the training-branch forward is covered.
    dim = 32
    n_heads = 4
    n_kv_heads = 2
    head_dim = dim // n_heads            # 8
    bsz = 2
    seq_len = 8                          # == max_seq_len (training-branch RoPE)

    key = jax.random.PRNGKey(0)
    kx, kq, kk, kvw, ko = jax.random.split(key, 5)
    x = jax.random.normal(kx, (bsz, seq_len, dim), dtype=jnp.float32)

    # nn.Linear weights passed pre-transposed -> (in_features, out_features)
    w_scale = 1.0 / math.sqrt(dim)
    wq = jax.random.normal(kq, (dim, n_heads * head_dim), dtype=jnp.float32) * w_scale
    wk = jax.random.normal(kk, (dim, n_kv_heads * head_dim), dtype=jnp.float32) * w_scale
    wv = jax.random.normal(kvw, (dim, n_kv_heads * head_dim), dtype=jnp.float32) * w_scale
    wo = jax.random.normal(ko, (n_heads * head_dim, dim), dtype=jnp.float32) * w_scale

    out = attention_pallas(x, wq, wk, wv, wo, n_heads=n_heads,
                           n_kv_heads=n_kv_heads, head_dim=head_dim)
    out = jax.block_until_ready(out)

    ref = attention_reference(x, wq, wk, wv, wo, n_heads=n_heads,
                              n_kv_heads=n_kv_heads, head_dim=head_dim)
    # bf16 matmuls (fp32 accumulation) -> slightly loose tolerance.
    np.testing.assert_allclose(np.asarray(out), np.asarray(ref),
                               rtol=3e-2, atol=3e-2)

    print("KERNEL_OK")
</pallas_src>

<mosaic_0001>
module attributes {stable_mosaic.version = 11 : i64} {
  func.func @_qkv_rope_kernel(%arg0: i32, %arg1: i32, %arg2: memref<1x8x32xbf16, #tpu.memory_space<vmem>>, %arg3: memref<32x64xbf16, #tpu.memory_space<vmem>>, %arg4: memref<8x4xf32, #tpu.memory_space<vmem>>, %arg5: memref<8x4xf32, #tpu.memory_space<vmem>>, %arg6: memref<1x4x8x8xbf16, #tpu.memory_space<vmem>>, %arg7: memref<1x2x8x8xbf16, #tpu.memory_space<vmem>>, %arg8: memref<1x2x8x8xbf16, #tpu.memory_space<vmem>>) attributes {dimension_semantics = [#tpu.dimension_semantics<parallel>, #tpu.dimension_semantics<parallel>], iteration_bounds = array<i64: 2, 1>, scalar_prefetch = 0 : i64, scratch_operands = 0 : i64, tpu.core_type = #tpu.core_type<tc>, window_params = [{transform_indices = @transform_0, window_bounds = array<i64: 1, 8, 32>}, {pipeline_mode = #tpu.pipeline_mode<synchronous>, transform_indices = @transform_1, window_bounds = array<i64: 32, 64>}, {transform_indices = @transform_2, window_bounds = array<i64: 8, 4>}, {transform_indices = @transform_3, window_bounds = array<i64: 8, 4>}, {transform_indices = @transform_4, window_bounds = array<i64: 1, 4, 8, 8>}, {transform_indices = @transform_5, window_bounds = array<i64: 1, 2, 8, 8>}, {transform_indices = @transform_6, window_bounds = array<i64: 1, 2, 8, 8>}]} {
    %c0 = arith.constant 0 : index
    %c0_0 = arith.constant 0 : index
    %c0_1 = arith.constant 0 : index
    %0 = vector.load %arg2[%c0, %c0_0, %c0_1] : memref<1x8x32xbf16, #tpu.memory_space<vmem>>, vector<1x8x32xbf16>
    %1 = vector.shape_cast %0 : vector<1x8x32xbf16> to vector<8x32xbf16>
    %c0_2 = arith.constant 0 : index
    %c0_3 = arith.constant 0 : index
    %2 = vector.load %arg3[%c0_2, %c0_3] : memref<32x64xbf16, #tpu.memory_space<vmem>>, vector<32x64xbf16>
    %cst = arith.constant dense<0.000000e+00> : vector<8x64xf32>
    %3 = tpu.matmul %1, %2, %cst {dimension_numbers = #tpu.dot_dimension_numbers<[1], [0], [0], [1], [0, 0, 1, 1], [], []>} : vector<8x32xbf16>, vector<32x64xbf16>, vector<8x64xf32> -> vector<8x64xf32>
    %c0_4 = arith.constant 0 : index
    %c0_5 = arith.constant 0 : index
    %4 = vector.load %arg4[%c0_4, %c0_5] : memref<8x4xf32, #tpu.memory_space<vmem>>, vector<8x4xf32>
    %c0_6 = arith.constant 0 : index
    %c0_7 = arith.constant 0 : index
    %5 = vector.load %arg5[%c0_6, %c0_7] : memref<8x4xf32, #tpu.memory_space<vmem>>, vector<8x4xf32>
    %6 = vector.extract_strided_slice %3 {offsets = [0, 0], sizes = [8, 4], strides = [1, 1]} : vector<8x64xf32> to vector<8x4xf32>
    %7 = vector.extract_strided_slice %3 {offsets = [0, 4], sizes = [8, 4], strides = [1, 1]} : vector<8x64xf32> to vector<8x4xf32>
    %8 = arith.mulf %6, %4 : vector<8x4xf32>
    %9 = arith.mulf %7, %5 : vector<8x4xf32>
    %10 = arith.subf %8, %9 : vector<8x4xf32>
    %11 = arith.truncf %10 : vector<8x4xf32> to vector<8x4xbf16>
    %c0_8 = arith.constant 0 : index
    %c0_9 = arith.constant 0 : index
    %c0_10 = arith.constant 0 : index
    %c0_11 = arith.constant 0 : index
    %12 = vector.load %arg6[%c0_8, %c0_9, %c0_10, %c0_11] : memref<1x4x8x8xbf16, #tpu.memory_space<vmem>>, vector<1x1x8x4xbf16>
    %13 = vector.shape_cast %12 : vector<1x1x8x4xbf16> to vector<8x4xbf16>
    %14 = vector.shape_cast %11 : vector<8x4xbf16> to vector<1x1x8x4xbf16>
    tpu.vector_store %arg6[%c0_8, %c0_9, %c0_10, %c0_11], %14 {strides = array<i32>} : memref<1x4x8x8xbf16, #tpu.memory_space<vmem>>, vector<1x1x8x4xbf16>,
    %15 = arith.mulf %6, %5 : vector<8x4xf32>
    %16 = arith.mulf %7, %4 : vector<8x4xf32>
    %17 = arith.addf %15, %16 : vector<8x4xf32>
    %18 = arith.truncf %17 : vector<8x4xf32> to vector<8x4xbf16>
    %c0_12 = arith.constant 0 : index
    %c0_13 = arith.constant 0 : index
    %c0_14 = arith.constant 0 : index
    %c4 = arith.constant 4 : index
    %19 = vector.load %arg6[%c0_12, %c0_13, %c0_14, %c4] : memref<1x4x8x8xbf16, #tpu.memory_space<vmem>>, vector<1x1x8x4xbf16>
    %20 = vector.shape_cast %19 : vector<1x1x8x4xbf16> to vector<8x4xbf16>
    %21 = vector.shape_cast %18 : vector<8x4xbf16> to vector<1x1x8x4xbf16>
    tpu.vector_store %arg6[%c0_12, %c0_13, %c0_14, %c4], %21 {strides = array<i32>} : memref<1x4x8x8xbf16, #tpu.memory_space<vmem>>, vector<1x1x8x4xbf16>,
    %22 = vector.extract_strided_slice %3 {offsets = [0, 8], sizes = [8, 4], strides = [1, 1]} : vector<8x64xf32> to vector<8x4xf32>
    %23 = vector.extract_strided_slice %3 {offsets = [0, 12], sizes = [8, 4], strides = [1, 1]} : vector<8x64xf32> to vector<8x4xf32>
    %24 = arith.mulf %22, %4 : vector<8x4xf32>
    %25 = arith.mulf %23, %5 : vector<8x4xf32>
    %26 = arith.subf %24, %25 : vector<8x4xf32>
    %27 = arith.truncf %26 : vector<8x4xf32> to vector<8x4xbf16>
    %c0_15 = arith.constant 0 : index
    %c1 = arith.constant 1 : index
    %c0_16 = arith.constant 0 : index
    %c0_17 = arith.constant 0 : index
    %28 = vector.load %arg6[%c0_15, %c1, %c0_16, %c0_17] : memref<1x4x8x8xbf16, #tpu.memory_space<vmem>>, vector<1x1x8x4xbf16>
    %29 = vector.shape_cast %28 : vector<1x1x8x4xbf16> to vector<8x4xbf16>
    %30 = vector.shape_cast %27 : vector<8x4xbf16> to vector<1x1x8x4xbf16>
    tpu.vector_store %arg6[%c0_15, %c1, %c0_16, %c0_17], %30 {strides = array<i32>} : memref<1x4x8x8xbf16, #tpu.memory_space<vmem>>, vector<1x1x8x4xbf16>,
    %31 = arith.mulf %22, %5 : vector<8x4xf32>
    %32 = arith.mulf %23, %4 : vector<8x4xf32>
    %33 = arith.addf %31, %32 : vector<8x4xf32>
    %34 = arith.truncf %33 : vector<8x4xf32> to vector<8x4xbf16>
    %c0_18 = arith.constant 0 : index
    %c1_19 = arith.constant 1 : index
    %c0_20 = arith.constant 0 : index
    %c4_21 = arith.constant 4 : index
    %35 = vector.load %arg6[%c0_18, %c1_19, %c0_20, %c4_21] : memref<1x4x8x8xbf16, #tpu.memory_space<vmem>>, vector<1x1x8x4xbf16>
    %36 = vector.shape_cast %35 : vector<1x1x8x4xbf16> to vector<8x4xbf16>
    %37 = vector.shape_cast %34 : vector<8x4xbf16> to vector<1x1x8x4xbf16>
    tpu.vector_store %arg6[%c0_18, %c1_19, %c0_20, %c4_21], %37 {strides = array<i32>} : memref<1x4x8x8xbf16, #tpu.memory_space<vmem>>, vector<1x1x8x4xbf16>,
    %38 = vector.extract_strided_slice %3 {offsets = [0, 16], sizes = [8, 4], strides = [1, 1]} : vector<8x64xf32> to vector<8x4xf32>
    %39 = vector.extract_strided_slice %3 {offsets = [0, 20], sizes = [8, 4], strides = [1, 1]} : vector<8x64xf32> to vector<8x4xf32>
    %40 = arith.mulf %38, %4 : vector<8x4xf32>
    %41 = arith.mulf %39, %5 : vector<8x4xf32>
    %42 = arith.subf %40, %41 : vector<8x4xf32>
    %43 = arith.truncf %42 : vector<8x4xf32> to vector<8x4xbf16>
    %c0_22 = arith.constant 0 : index
    %c2 = arith.constant 2 : index
    %c0_23 = arith.constant 0 : index
    %c0_24 = arith.constant 0 : index
    %44 = vector.load %arg6[%c0_22, %c2, %c0_23, %c0_24] : memref<1x4x8x8xbf16, #tpu.memory_space<vmem>>, vector<1x1x8x4xbf16>
    %45 = vector.shape_cast %44 : vector<1x1x8x4xbf16> to vector<8x4xbf16>
    %46 = vector.shape_cast %43 : vector<8x4xbf16> to vector<1x1x8x4xbf16>
    tpu.vector_store %arg6[%c0_22, %c2, %c0_23, %c0_24], %46 {strides = array<i32>} : memref<1x4x8x8xbf16, #tpu.memory_space<vmem>>, vector<1x1x8x4xbf16>,
    %47 = arith.mulf %38, %5 : vector<8x4xf32>
    %48 = arith.mulf %39, %4 : vector<8x4xf32>
    %49 = arith.addf %47, %48 : vector<8x4xf32>
    %50 = arith.truncf %49 : vector<8x4xf32> to vector<8x4xbf16>
    %c0_25 = arith.constant 0 : index
    %c2_26 = arith.constant 2 : index
    %c0_27 = arith.constant 0 : index
    %c4_28 = arith.constant 4 : index
    %51 = vector.load %arg6[%c0_25, %c2_26, %c0_27, %c4_28] : memref<1x4x8x8xbf16, #tpu.memory_space<vmem>>, vector<1x1x8x4xbf16>
    %52 = vector.shape_cast %51 : vector<1x1x8x4xbf16> to vector<8x4xbf16>
    %53 = vector.shape_cast %50 : vector<8x4xbf16> to vector<1x1x8x4xbf16>
    tpu.vector_store %arg6[%c0_25, %c2_26, %c0_27, %c4_28], %53 {strides = array<i32>} : memref<1x4x8x8xbf16, #tpu.memory_space<vmem>>, vector<1x1x8x4xbf16>,
    %54 = vector.extract_strided_slice %3 {offsets = [0, 24], sizes = [8, 4], strides = [1, 1]} : vector<8x64xf32> to vector<8x4xf32>
    %55 = vector.extract_strided_slice %3 {offsets = [0, 28], sizes = [8, 4], strides = [1, 1]} : vector<8x64xf32> to vector<8x4xf32>
    %56 = arith.mulf %54, %4 : vector<8x4xf32>
    %57 = arith.mulf %55, %5 : vector<8x4xf32>
    %58 = arith.subf %56, %57 : vector<8x4xf32>
    %59 = arith.truncf %58 : vector<8x4xf32> to vector<8x4xbf16>
    %c0_29 = arith.constant 0 : index
    %c3 = arith.constant 3 : index
    %c0_30 = arith.constant 0 : index
    %c0_31 = arith.constant 0 : index
    %60 = vector.load %arg6[%c0_29, %c3, %c0_30, %c0_31] : memref<1x4x8x8xbf16, #tpu.memory_space<vmem>>, vector<1x1x8x4xbf16>
    %61 = vector.shape_cast %60 : vector<1x1x8x4xbf16> to vector<8x4xbf16>
    %62 = vector.shape_cast %59 : vector<8x4xbf16> to vector<1x1x8x4xbf16>
    tpu.vector_store %arg6[%c0_29, %c3, %c0_30, %c0_31], %62 {strides = array<i32>} : memref<1x4x8x8xbf16, #tpu.memory_space<vmem>>, vector<1x1x8x4xbf16>,
    %63 = arith.mulf %54, %5 : vector<8x4xf32>
    %64 = arith.mulf %55, %4 : vector<8x4xf32>
    %65 = arith.addf %63, %64 : vector<8x4xf32>
    %66 = arith.truncf %65 : vector<8x4xf32> to vector<8x4xbf16>
    %c0_32 = arith.constant 0 : index
    %c3_33 = arith.constant 3 : index
    %c0_34 = arith.constant 0 : index
    %c4_35 = arith.constant 4 : index
    %67 = vector.load %arg6[%c0_32, %c3_33, %c0_34, %c4_35] : memref<1x4x8x8xbf16, #tpu.memory_space<vmem>>, vector<1x1x8x4xbf16>
    %68 = vector.shape_cast %67 : vector<1x1x8x4xbf16> to vector<8x4xbf16>
    %69 = vector.shape_cast %66 : vector<8x4xbf16> to vector<1x1x8x4xbf16>
    tpu.vector_store %arg6[%c0_32, %c3_33, %c0_34, %c4_35], %69 {strides = array<i32>} : memref<1x4x8x8xbf16, #tpu.memory_space<vmem>>, vector<1x1x8x4xbf16>,
    %70 = vector.extract_strided_slice %3 {offsets = [0, 32], sizes = [8, 4], strides = [1, 1]} : vector<8x64xf32> to vector<8x4xf32>
    %71 = vector.extract_strided_slice %3 {offsets = [0, 36], sizes = [8, 4], strides = [1, 1]} : vector<8x64xf32> to vector<8x4xf32>
    %72 = arith.mulf %70, %4 : vector<8x4xf32>
    %73 = arith.mulf %71, %5 : vector<8x4xf32>
    %74 = arith.subf %72, %73 : vector<8x4xf32>
    %75 = arith.truncf %74 : vector<8x4xf32> to vector<8x4xbf16>
    %c0_36 = arith.constant 0 : index
    %c0_37 = arith.constant 0 : index
    %c0_38 = arith.constant 0 : index
    %c0_39 = arith.constant 0 : index
    %76 = vector.load %arg7[%c0_36, %c0_37, %c0_38, %c0_39] : memref<1x2x8x8xbf16, #tpu.memory_space<vmem>>, vector<1x1x8x4xbf16>
    %77 = vector.shape_cast %76 : vector<1x1x8x4xbf16> to vector<8x4xbf16>
    %78 = vector.shape_cast %75 : vector<8x4xbf16> to vector<1x1x8x4xbf16>
    tpu.vector_store %arg7[%c0_36, %c0_37, %c0_38, %c0_39], %78 {strides = array<i32>} : memref<1x2x8x8xbf16, #tpu.memory_space<vmem>>, vector<1x1x8x4xbf16>,
    %79 = arith.mulf %70, %5 : vector<8x4xf32>
    %80 = arith.mulf %71, %4 : vector<8x4xf32>
    %81 = arith.addf %79, %80 : vector<8x4xf32>
    %82 = arith.truncf %81 : vector<8x4xf32> to vector<8x4xbf16>
    %c0_40 = arith.constant 0 : index
    %c0_41 = arith.constant 0 : index
    %c0_42 = arith.constant 0 : index
    %c4_43 = arith.constant 4 : index
    %83 = vector.load %arg7[%c0_40, %c0_41, %c0_42, %c4_43] : memref<1x2x8x8xbf16, #tpu.memory_space<vmem>>, vector<1x1x8x4xbf16>
    %84 = vector.shape_cast %83 : vector<1x1x8x4xbf16> to vector<8x4xbf16>
    %85 = vector.shape_cast %82 : vector<8x4xbf16> to vector<1x1x8x4xbf16>
    tpu.vector_store %arg7[%c0_40, %c0_41, %c0_42, %c4_43], %85 {strides = array<i32>} : memref<1x2x8x8xbf16, #tpu.memory_space<vmem>>, vector<1x1x8x4xbf16>,
    %86 = vector.extract_strided_slice %3 {offsets = [0, 48], sizes = [8, 8], strides = [1, 1]} : vector<8x64xf32> to vector<8x8xf32>
    %87 = arith.truncf %86 : vector<8x8xf32> to vector<8x8xbf16>
    %c0_44 = arith.constant 0 : index
    %c0_45 = arith.constant 0 : index
    %c0_46 = arith.constant 0 : index
    %c0_47 = arith.constant 0 : index
    %88 = vector.load %arg8[%c0_44, %c0_45, %c0_46, %c0_47] : memref<1x2x8x8xbf16, #tpu.memory_space<vmem>>, vector<1x1x8x8xbf16>
    %89 = vector.shape_cast %88 : vector<1x1x8x8xbf16> to vector<8x8xbf16>
    %90 = vector.shape_cast %87 : vector<8x8xbf16> to vector<1x1x8x8xbf16>
    tpu.vector_store %arg8[%c0_44, %c0_45, %c0_46, %c0_47], %90 {strides = array<i32>} : memref<1x2x8x8xbf16, #tpu.memory_space<vmem>>, vector<1x1x8x8xbf16>,
    %91 = vector.extract_strided_slice %3 {offsets = [0, 40], sizes = [8, 4], strides = [1, 1]} : vector<8x64xf32> to vector<8x4xf32>
    %92 = vector.extract_strided_slice %3 {offsets = [0, 44], sizes = [8, 4], strides = [1, 1]} : vector<8x64xf32> to vector<8x4xf32>
    %93 = arith.mulf %91, %4 : vector<8x4xf32>
    %94 = arith.mulf %92, %5 : vector<8x4xf32>
    %95 = arith.subf %93, %94 : vector<8x4xf32>
    %96 = arith.truncf %95 : vector<8x4xf32> to vector<8x4xbf16>
    %c0_48 = arith.constant 0 : index
    %c1_49 = arith.constant 1 : index
    %c0_50 = arith.constant 0 : index
    %c0_51 = arith.constant 0 : index
    %97 = vector.load %arg7[%c0_48, %c1_49, %c0_50, %c0_51] : memref<1x2x8x8xbf16, #tpu.memory_space<vmem>>, vector<1x1x8x4xbf16>
    %98 = vector.shape_cast %97 : vector<1x1x8x4xbf16> to vector<8x4xbf16>
    %99 = vector.shape_cast %96 : vector<8x4xbf16> to vector<1x1x8x4xbf16>
    tpu.vector_store %arg7[%c0_48, %c1_49, %c0_50, %c0_51], %99 {strides = array<i32>} : memref<1x2x8x8xbf16, #tpu.memory_space<vmem>>, vector<1x1x8x4xbf16>,
    %100 = arith.mulf %91, %5 : vector<8x4xf32>
    %101 = arith.mulf %92, %4 : vector<8x4xf32>
    %102 = arith.addf %100, %101 : vector<8x4xf32>
    %103 = arith.truncf %102 : vector<8x4xf32> to vector<8x4xbf16>
    %c0_52 = arith.constant 0 : index
    %c1_53 = arith.constant 1 : index
    %c0_54 = arith.constant 0 : index
    %c4_55 = arith.constant 4 : index
    %104 = vector.load %arg7[%c0_52, %c1_53, %c0_54, %c4_55] : memref<1x2x8x8xbf16, #tpu.memory_space<vmem>>, vector<1x1x8x4xbf16>
    %105 = vector.shape_cast %104 : vector<1x1x8x4xbf16> to vector<8x4xbf16>
    %106 = vector.shape_cast %103 : vector<8x4xbf16> to vector<1x1x8x4xbf16>
    tpu.vector_store %arg7[%c0_52, %c1_53, %c0_54, %c4_55], %106 {strides = array<i32>} : memref<1x2x8x8xbf16, #tpu.memory_space<vmem>>, vector<1x1x8x4xbf16>,
    %107 = vector.extract_strided_slice %3 {offsets = [0, 56], sizes = [8, 8], strides = [1, 1]} : vector<8x64xf32> to vector<8x8xf32>
    %108 = arith.truncf %107 : vector<8x8xf32> to vector<8x8xbf16>
    %c0_56 = arith.constant 0 : index
    %c1_57 = arith.constant 1 : index
    %c0_58 = arith.constant 0 : index
    %c0_59 = arith.constant 0 : index
    %109 = vector.load %arg8[%c0_56, %c1_57, %c0_58, %c0_59] : memref<1x2x8x8xbf16, #tpu.memory_space<vmem>>, vector<1x1x8x8xbf16>
    %110 = vector.shape_cast %109 : vector<1x1x8x8xbf16> to vector<8x8xbf16>
    %111 = vector.shape_cast %108 : vector<8x8xbf16> to vector<1x1x8x8xbf16>
    tpu.vector_store %arg8[%c0_56, %c1_57, %c0_58, %c0_59], %111 {strides = array<i32>} : memref<1x2x8x8xbf16, #tpu.memory_space<vmem>>, vector<1x1x8x8xbf16>,
    return
  }
  func.func @transform_0(%arg0: i32, %arg1: i32) -> (i32, i32, i32) {
    %c0_i32 = arith.constant 0 : i32
    %c0_i32_0 = arith.constant 0 : i32
    return %arg0, %arg1, %c0_i32 : i32, i32, i32
  }
  func.func @transform_1(%arg0: i32, %arg1: i32) -> (i32, i32) {
    %c0_i32 = arith.constant 0 : i32
    %c0_i32_0 = arith.constant 0 : i32
    %c0_i32_1 = arith.constant 0 : i32
    return %c0_i32, %c0_i32_0 : i32, i32
  }
  func.func @transform_2(%arg0: i32, %arg1: i32) -> (i32, i32) {
    %c0_i32 = arith.constant 0 : i32
    %c0_i32_0 = arith.constant 0 : i32
    return %arg1, %c0_i32 : i32, i32
  }
  func.func @transform_3(%arg0: i32, %arg1: i32) -> (i32, i32) {
    %c0_i32 = arith.constant 0 : i32
    %c0_i32_0 = arith.constant 0 : i32
    return %arg1, %c0_i32 : i32, i32
  }
  func.func @transform_4(%arg0: i32, %arg1: i32) -> (i32, i32, i32, i32) {
    %c0_i32 = arith.constant 0 : i32
    %c0_i32_0 = arith.constant 0 : i32
    %c0_i32_1 = arith.constant 0 : i32
    return %arg0, %c0_i32, %arg1, %c0_i32_0 : i32, i32, i32, i32
  }
  func.func @transform_5(%arg0: i32, %arg1: i32) -> (i32, i32, i32, i32) {
    %c0_i32 = arith.constant 0 : i32
    %c0_i32_0 = arith.constant 0 : i32
    %c0_i32_1 = arith.constant 0 : i32
    return %arg0, %c0_i32, %arg1, %c0_i32_0 : i32, i32, i32, i32
  }
  func.func @transform_6(%arg0: i32, %arg1: i32) -> (i32, i32, i32, i32) {
    %c0_i32 = arith.constant 0 : i32
    %c0_i32_0 = arith.constant 0 : i32
    %c0_i32_1 = arith.constant 0 : i32
    return %arg0, %c0_i32, %arg1, %c0_i32_0 : i32, i32, i32, i32
  }
}

</mosaic_0001>

<llo_original>
// kernel: tpu_custom_call.1
$region0: #{tpu_custom_call.1}
  #allocation0 [shape = 'u32[]', space=smem, size = 0x4, offset = 0x4, fixed_abs, tag = 'smem constant byte address 0x4 - core index']
  #allocation1 [shape = 'u32[144,128]{1,0:T(1,128)}', space=vmem, size = 0x12000, scoped, tag = 'internal scratch']
  %s0 = inlined_call_operand.vmem [shape: bf16[2,8,32], index: 0, kind: input, shape index: {}]
  %s1 = inlined_call_operand.vmem [shape: bf16[32,64], index: 1, kind: input, shape index: {}]
  %s2 = inlined_call_operand.vmem [shape: f32[8,4], index: 2, kind: input, shape index: {}]
  %s3 = inlined_call_operand.vmem [shape: f32[8,4], index: 3, kind: input, shape index: {}]
  %s4 = inlined_call_operand.hbm [shape: bf16[2,4,8,8], index: 4, kind: output, shape index: {0}]
  %s5 = inlined_call_operand.hbm [shape: bf16[2,2,8,8], index: 5, kind: output, shape index: {1}]
  %s6 = inlined_call_operand.hbm [shape: bf16[2,2,8,8], index: 6, kind: output, shape index: {2}]
  %7 = xla_tuple %s4, %s5, %s6
  %s8 = sld [smem:[#allocation0]]
  $region65: #{tpu_custom_call.1} parent=0
    _
  %s10 = ssub.s32 1, %s8
  %s11 = scalar_select 0, %s10, %s8
  $region1: #{tpu_custom_call.1} parent=0
    #allocation2 [shape = 'u8[16384]{0}', space=vmem, size = 0x4000, scoped, tag = 'output window, operand 0']
    #allocation3 [shape = 's32[2]{0}', space=sflag, size = 0x8, scoped, tag = 'scoped memory for tpu_custom_call.1']
    #allocation4 [shape = 'u8[8192]{0}', space=vmem, size = 0x2000, scoped, tag = 'output window, operand 1']
    #allocation5 [shape = 's32[2]{0}', space=sflag, size = 0x8, scoped, tag = 'scoped memory for tpu_custom_call.1']
    #allocation6 [shape = 'u8[8192]{0}', space=vmem, size = 0x2000, scoped, tag = 'output window, operand 2']
    %12 = vsyncpa [#allocation3], 0
    %s13 = scalar_lea.sflag [#allocation3], 1
    %14 = vsyncpa %s13, 0
    %15 = vsyncpa [#allocation5], 0
    %s16 = scalar_lea.sflag [#allocation5], 1
    %17 = vsyncpa %s16, 0
    loop: start=0, step=1, limit=4
    $region2: #{tpu_custom_call.1} parent=1 // loop_pre_header
      _
    $region3: #{tpu_custom_call.1} parent=1 // loop_header
      %s19 = sphi 0, %s23
      %p20 = scmp.ge.s32.totalorder %s19, 4
      %s26 = sphi 0, %s38
      %s27 = sphi 0, %s34
      %s28 = sphi 0, %s26
      %s29 = sphi 0, %s27
      %s30 = sphi 0, %s28
      %s31 = sphi 0, %s29
      %s43 = sphi 0, %s45
      %s46 = sphi 0, %s43
      %s47 = sphi 0, %s46
      %s63 = sphi 0, %s47
      %s67 = sphi 0, %s67
      %s69 = sphi 0, %s67
      %s70 = sphi 0, %s69
      %s84 = sphi 0, %s70
      %s90 = sphi 0, %s92
      %s93 = sphi 0, %s90
      %s94 = sphi 0, %s93
      %s110 = sphi 0, %s94
      %s116 = sphi 0, %s118
      %s119 = sphi 0, %s116
      %s120 = sphi 0, %s119
      %s136 = sphi 0, %s120
      %s144 = sphi 0, %s146
      %s147 = sphi 0, %s144
      %s148 = sphi 0, %s147
      %s164 = sphi 0, %s148
      %s172 = sphi 0, %s174
      %s175 = sphi 0, %s172
      %s176 = sphi 0, %s175
      %s192 = sphi 0, %s176
      %s200 = sphi 0, %s202
      %s203 = sphi 0, %s200
      %s204 = sphi 0, %s203
      %s220 = sphi 0, %s204
    $region4: #{tpu_custom_call.1} parent=1 // loop_header_branch
      %22 = sbr.rel (%p20) target = $region8
    $region5: #{tpu_custom_call.1} parent=1 // loop_body
      %s24 = ssub.s32 %s19, 1
      %s25 = ssub.s32 %s19, 2
      %s32 = sadd.s32 1, %s27
      %p33 = scmp.ge.s32.totalorder %s32, 1
      %s34 = scalar_select %p33, 0, %s32
      %s35 = sadd.s32 1, %s26
      %s36 = scalar_select %p33, %s35, %s26
      %p37 = scmp.ge.s32.totalorder %s36, 2
      %s38 = scalar_select %p37, 0, %s36
      %s39 = ssub.s32 %s26, %s38
      %s40 = ssub.s32 %s27, %s34
      %s41 = sor.u32 %s39, %s40
      %p42 = scmp.eq.s32.totalorder %s41, 0
      %s44 = sadd.s32 %s43, 1
      %s45 = scalar_select %p42, %s43, %s44
      %p48 = pneg %p42
      %p49 = scmp.eq.s32.totalorder %s19, 1
      %p50 = por %p48, %p49
      %p51 = scmp.ne.s32.totalorder %s43, %s46
      %p52 = scmp.eq.s32.totalorder %s19, 0
      %p53 = por %p51, %p52
      %p54 = scmp.ne.s32.totalorder %s43, %s46
      %p55 = scmp.eq.s32.totalorder %s24, 1
      %p56 = por %p54, %p55
      %p57 = scmp.ne.s32.totalorder %s46, %s47
      %p58 = scmp.eq.s32.totalorder %s24, 0
      %p59 = por %p57, %p58
      %p60 = scmp.ne.s32.totalorder %s46, %s47
      %p61 = scmp.eq.s32.totalorder %s25, 1
      %p62 = por %p60, %p61
      %p64 = scmp.ne.s32.totalorder %s47, %s63
      %p65 = scmp.eq.s32.totalorder %s25, 0
      %p66 = por %p64, %p65
      %s68 = sadd.s32 %s67, 1
      %p71 = scmp.eq.s32.totalorder %s19, 1
      %p72 = scmp.ne.s32.totalorder %s67, %s69
      %p73 = scmp.eq.s32.totalorder %s19, 0
      %p74 = por %p72, %p73
      %p75 = scmp.ne.s32.totalorder %s67, %s69
      %p76 = scmp.eq.s32.totalorder %s24, 1
      %p77 = por %p75, %p76
      %p78 = scmp.ne.s32.totalorder %s69, %s70
      %p79 = scmp.eq.s32.totalorder %s24, 0
      %p80 = por %p78, %p79
      %p81 = scmp.ne.s32.totalorder %s69, %s70
      %p82 = scmp.eq.s32.totalorder %s25, 1
      %p83 = por %p81, %p82
      %p85 = scmp.ne.s32.totalorder %s70, %s84
      %p86 = scmp.eq.s32.totalorder %s25, 0
      %p87 = por %p85, %p86
      %s88 = ssub.s32 %s27, %s34
      %p89 = scmp.eq.s32.totalorder %s88, 0
      %s91 = sadd.s32 %s90, 1
      %s92 = scalar_select %p89, %s90, %s91
      %p95 = pneg %p89
      %p96 = scmp.eq.s32.totalorder %s19, 1
      %p97 = por %p95, %p96
      %p98 = scmp.ne.s32.totalorder %s90, %s93
      %p99 = scmp.eq.s32.totalorder %s19, 0
      %p100 = por %p98, %p99
      %p101 = scmp.ne.s32.totalorder %s90, %s93
      %p102 = scmp.eq.s32.totalorder %s24, 1
      %p103 = por %p101, %p102
      %p104 = scmp.ne.s32.totalorder %s93, %s94
      %p105 = scmp.eq.s32.totalorder %s24, 0
      %p106 = por %p104, %p105
      %p107 = scmp.ne.s32.totalorder %s93, %s94
      %p108 = scmp.eq.s32.totalorder %s25, 1
      %p109 = por %p107, %p108
      %p111 = scmp.ne.s32.totalorder %s94, %s110
      %p112 = scmp.eq.s32.totalorder %s25, 0
      %p113 = por %p111, %p112
      %s114 = ssub.s32 %s27, %s34
      %p115 = scmp.eq.s32.totalorder %s114, 0
      %s117 = sadd.s32 %s116, 1
      %s118 = scalar_select %p115, %s116, %s117
      %p121 = pneg %p115
      %p122 = scmp.eq.s32.totalorder %s19, 1
      %p123 = por %p121, %p122
      %p124 = scmp.ne.s32.totalorder %s116, %s119
      %p125 = scmp.eq.s32.totalorder %s19, 0
      %p126 = por %p124, %p125
      %p127 = scmp.ne.s32.totalorder %s116, %s119
      %p128 = scmp.eq.s32.totalorder %s24, 1
      %p129 = por %p127, %p128
      %p130 = scmp.ne.s32.totalorder %s119, %s120
      %p131 = scmp.eq.s32.totalorder %s24, 0
      %p132 = por %p130, %p131
      %p133 = scmp.ne.s32.totalorder %s119, %s120
      %p134 = scmp.eq.s32.totalorder %s25, 1
      %p135 = por %p133, %p134
      %p137 = scmp.ne.s32.totalorder %s120, %s136
      %p138 = scmp.eq.s32.totalorder %s25, 0
      %p139 = por %p137, %p138
      %s140 = ssub.s32 %s26, %s38
      %s141 = ssub.s32 %s27, %s34
      %s142 = sor.u32 %s140, %s141
      %p143 = scmp.eq.s32.totalorder %s142, 0
      %s145 = sadd.s32 %s144, 1
      %s146 = scalar_select %p143, %s144, %s145
      %p149 = pneg %p143
      %p150 = scmp.eq.s32.totalorder %s19, 1
      %p151 = por %p149, %p150
      %p152 = scmp.ne.s32.totalorder %s144, %s147
      %p153 = scmp.eq.s32.totalorder %s19, 0
      %p154 = por %p152, %p153
      %p155 = scmp.ne.s32.totalorder %s144, %s147
      %p156 = scmp.eq.s32.totalorder %s24, 1
      %p157 = por %p155, %p156
      %p158 = scmp.ne.s32.totalorder %s147, %s148
      %p159 = scmp.eq.s32.totalorder %s24, 0
      %p160 = por %p158, %p159
      %p161 = scmp.ne.s32.totalorder %s147, %s148
      %p162 = scmp.eq.s32.totalorder %s25, 1
      %p163 = por %p161, %p162
      %p165 = scmp.ne.s32.totalorder %s148, %s164
      %p166 = scmp.eq.s32.totalorder %s25, 0
      %p167 = por %p165, %p166
      %s168 = ssub.s32 %s26, %s38
      %s169 = ssub.s32 %s27, %s34
      %s170 = sor.u32 %s168, %s169
      %p171 = scmp.eq.s32.totalorder %s170, 0
      %s173 = sadd.s32 %s172, 1
      %s174 = scalar_select %p171, %s172, %s173
      %p177 = pneg %p171
      %p178 = scmp.eq.s32.totalorder %s19, 1
      %p179 = por %p177, %p178
      %p180 = scmp.ne.s32.totalorder %s172, %s175
      %p181 = scmp.eq.s32.totalorder %s19, 0
      %p182 = por %p180, %p181
      %p183 = scmp.ne.s32.totalorder %s172, %s175
      %p184 = scmp.eq.s32.totalorder %s24, 1
      %p185 = por %p183, %p184
      %p186 = scmp.ne.s32.totalorder %s175, %s176
      %p187 = scmp.eq.s32.totalorder %s24, 0
      %p188 = por %p186, %p187
      %p189 = scmp.ne.s32.totalorder %s175, %s176
      %p190 = scmp.eq.s32.totalorder %s25, 1
      %p191 = por %p189, %p190
      %p193 = scmp.ne.s32.totalorder %s176, %s192
      %p194 = scmp.eq.s32.totalorder %s25, 0
      %p195 = por %p193, %p194
      %s196 = ssub.s32 %s26, %s38
      %s197 = ssub.s32 %s27, %s34
      %s198 = sor.u32 %s196, %s197
      %p199 = scmp.eq.s32.totalorder %s198, 0
      %s201 = sadd.s32 %s200, 1
      %s202 = scalar_select %p199, %s200, %s201
      %p205 = pneg %p199
      %p206 = scmp.eq.s32.totalorder %s19, 1
      %p207 = por %p205, %p206
      %p208 = scmp.ne.s32.totalorder %s200, %s203
      %p209 = scmp.eq.s32.totalorder %s19, 0
      %p210 = por %p208, %p209
      %p211 = scmp.ne.s32.totalorder %s200, %s203
      %p212 = scmp.eq.s32.totalorder %s24, 1
      %p213 = por %p211, %p212
      %p214 = scmp.ne.s32.totalorder %s203, %s204
      %p215 = scmp.eq.s32.totalorder %s24, 0
      %p216 = por %p214, %p215
      %p217 = scmp.ne.s32.totalorder %s203, %s204
      %p218 = scmp.eq.s32.totalorder %s25, 1
      %p219 = por %p217, %p218
      %p221 = scmp.ne.s32.totalorder %s204, %s220
      %p222 = scmp.eq.s32.totalorder %s25, 0
      %p223 = por %p221, %p222
      %p224 = scmp.le.s32.totalorder 1, %s19
      %p225 = scmp.lt.s32.totalorder %s19, 3
      %p226 = pnand %p224, %p225
      %p227 = pneg %p226
      // Predicated region
      $region9: #{tpu_custom_call.1} parent=5 // pred_check
        _
      $region10: #{tpu_custom_call.1} parent=5 // pred_check_branch
        %229 = sbr.rel (%p226) target = $region12
      $region11: #{tpu_custom_call.1} parent=5 // pred_region
        %s230 = ssub.s32 %s19, 1
        // Predicated region
        $region13: #{tpu_custom_call.1} parent=11 // pred_check
          %p231 = pneg %p80
        $region14: #{tpu_custom_call.1} parent=11 // pred_check_branch
          %233 = sbr.rel (%p231) target = $region16
        $region15: #{tpu_custom_call.1} parent=11 // pred_region
          _
        $region16: #{tpu_custom_call.1} parent=11 // pred_fallthru
          _
        // Predicated region
        $region17: #{tpu_custom_call.1} parent=11 // pred_check
          %p234 = pneg %p106
        $region18: #{tpu_custom_call.1} parent=11 // pred_check_branch
          %236 = sbr.rel (%p234) target = $region20
        $region19: #{tpu_custom_call.1} parent=11 // pred_region
          %p237 = scmp.lt.s32.totalorder %s29, 0
          %s238 = scalar_select %p237, %s29, 0
          %s239 = smul.addr %s238, 8
          %s240 = scalar_lea.vmem %s2, %s239
        $region20: #{tpu_custom_call.1} parent=11 // pred_fallthru
          _
        // Predicated region
        $region21: #{tpu_custom_call.1} parent=11 // pred_check
          %p241 = pneg %p132
        $region22: #{tpu_custom_call.1} parent=11 // pred_check_branch
          %243 = sbr.rel (%p241) target = $region24
        $region23: #{tpu_custom_call.1} parent=11 // pred_region
          %p244 = scmp.lt.s32.totalorder %s29, 0
          %s245 = scalar_select %p244, %s29, 0
          %s246 = smul.addr %s245, 8
          %s247 = scalar_lea.vmem %s3, %s246
        $region24: #{tpu_custom_call.1} parent=11 // pred_fallthru
          _
      $region12: #{tpu_custom_call.1} parent=5 // pred_fallthru
        _
      %p248 = scmp.lt.s32.totalorder %s19, 2
      // Predicated region
      $region25: #{tpu_custom_call.1} parent=5 // pred_check
        %p249 = pneg %p248
      $region26: #{tpu_custom_call.1} parent=5 // pred_check_branch
        %251 = sbr.rel (%p249) target = $region28
      $region27: #{tpu_custom_call.1} parent=5 // pred_region
        // Predicated region
        $region29: #{tpu_custom_call.1} parent=27 // pred_check
          %p252 = pneg %p53
        $region30: #{tpu_custom_call.1} parent=27 // pred_check_branch
          %254 = sbr.rel (%p252) target = $region32
        $region31: #{tpu_custom_call.1} parent=27 // pred_region
          %p255 = scmp.lt.s32.totalorder %s26, 1
          %s256 = scalar_select %p255, %s26, 1
          %p257 = scmp.lt.s32.totalorder %s27, 0
          %s258 = scalar_select %p257, %s27, 0
          %s259 = sadd.s32 %s258, %s256
          %s260 = smul.addr %s259, 4
          %s261 = scalar_lea.vmem %s0, %s260
        $region32: #{tpu_custom_call.1} parent=27 // pred_fallthru
          _
      $region28: #{tpu_custom_call.1} parent=5 // pred_fallthru
        _
      %p262 = scmp.le.s32.totalorder 1, %s19
      %p263 = scmp.lt.s32.totalorder %s19, 3
      %p264 = pnand %p262, %p263
      %p265 = pneg %p264
      // Predicated region
      $region33: #{tpu_custom_call.1} parent=5 // pred_check
        _
      $region34: #{tpu_custom_call.1} parent=5 // pred_check_branch
        %267 = sbr.rel (%p264) target = $region36
      $region35: #{tpu_custom_call.1} parent=5 // pred_region
        %s268 = ssub.s32 %s19, 1
        %p269 = scmp.lt.s32.totalorder %s28, 1
        %s270 = scalar_select %p269, %s28, 1
        %p271 = scmp.lt.s32.totalorder %s29, 0
        %s272 = scalar_select %p271, %s29, 0
        %s273 = sadd.s32 %s272, %s270
        %s274 = smul.addr %s273, 4
        %s275 = scalar_lea.vmem %s0, %s274
        %p276 = pneg %p59
        %p277 = pneg %p56
        %p278 = pneg %p80
        %p279 = pneg %p77
        %p280 = scmp.lt.s32.totalorder %s29, 0
        %s281 = scalar_select %p280, %s29, 0
        %s282 = smul.addr %s281, 8
        %s283 = scalar_lea.vmem %s2, %s282
        %p284 = pneg %p106
        %p285 = pneg %p103
        %p286 = scmp.lt.s32.totalorder %s29, 0
        %s287 = scalar_select %p286, %s29, 0
        %s288 = smul.addr %s287, 8
        %s289 = scalar_lea.vmem %s3, %s288
        %p290 = pneg %p132
        %p291 = pneg %p129
        %p292 = pneg %p160
        %p293 = pneg %p157
        %s294 = sand.u32 %s147, 1
        %s295 = scalar_lea.sflag [#allocation3], %s294
        %s296 = sand.u32 %s147, 1
        %s297 = smul.addr %s296, 16
        %s298 = scalar_lea.vmem [#allocation2], %s297
        %p299 = pneg %p188
        %p300 = pneg %p185
        %s301 = sand.u32 %s24, 1
        %s302 = scalar_lea.sflag [#allocation5], %s301
        %s303 = sand.u32 %s175, 1
        %s304 = smul.addr %s303, 8
        %s305 = scalar_lea.vmem [#allocation4], %s304
        %p306 = pneg %p216
        %p307 = pneg %p213
        %s308 = sand.u32 %s24, 1
        %s309 = scalar_lea.sflag [#allocation5], %s308
        %s310 = sand.u32 %s203, 1
        %s311 = smul.addr %s310, 8
        %s312 = scalar_lea.vmem [#allocation6], %s311
        %p313 = scmp.lt.s32.totalorder %s28, 1
        %s314 = scalar_select %p313, %s28, 1
        %p315 = scmp.lt.s32.totalorder %s29, 0
        %s316 = scalar_select %p315, %s29, 0
        %s317 = sadd.s32 %s316, %s314
        %s318 = smul.addr %s317, 4
        %s319 = scalar_lea.vmem %s0, %s318
        %p320 = scmp.lt.s32.totalorder %s29, 0
        %s321 = scalar_select %p320, %s29, 0
        %s322 = smul.addr %s321, 8
        %s323 = scalar_lea.vmem %s2, %s322
        %p324 = scmp.lt.s32.totalorder %s29, 0
        %s325 = scalar_select %p324, %s29, 0
        %s326 = smul.addr %s325, 8
        %s327 = scalar_lea.vmem %s3, %s326
        %v329 = vld [vmem:[%s319] sm:$0xf]
        %v330 = vld [vmem:[%s1] sm:$0xf]
        %v331 = vld [vmem:[%s1 + $0x4] sm:$0xf]
        %v332 = vld [vmem:[%s1 + $0x8] sm:$0xf]
        %v333 = vld [vmem:[%s1 + $0xc] sm:$0xf]
        %v338 = vunpack.c.l.b16 %v330
        %v339 = vunpack.c.l.b16 %v331
        %v340 = vunpack.c.l.b16 %v332
        %v341 = vunpack.c.l.b16 %v333
        %v342 = vpack.c.b16 %v339, %v338
        %v343 = vpack.c.b16 %v341, %v340
        %vm346 = vcmask 261120
        %v348 = vsel %vm346, %v329, 0
        %350 = vmatprep.subr.bf16.mxu0 0
        %351 = vmatpush1.bf16.msra.mxu0 %v342
        %352 = vmatprep.subr.bf16.mxu0 0
        %353 = vmatpush1.bf16.msra.mxu0 %v343
        %354 = vmatprep.subr.bf16.mxu0 0
        %355 = vmatpush1.bf16.msra.mxu0 0
        %356 = vmatprep.subr.bf16.mxu0 0
        %357 = vmatpush1.bf16.msra.mxu0 0
        %358 = vmatprep.subr.bf16.mxu0 0
        %359 = vmatpush1.bf16.msra.mxu0 0
        %360 = vmatprep.subr.bf16.mxu0 0
        %361 = vmatpush1.bf16.msra.mxu0 0
        %362 = vmatprep.subr.bf16.mxu0 0
        %363 = vmatpush1.bf16.msra.mxu0 0
        %364 = vmatprep.subr.bf16.mxu0 0
        %365 = vmatpush1.bf16.msra.mxu0 0
        %366 = vmatprep.subr.bf16.mxu0 0
        %367 = vmatpush1.bf16.msra.mxu0 0
        %368 = vmatprep.subr.bf16.mxu0 0
        %369 = vmatpush1.bf16.msra.mxu0 0
        %370 = vmatprep.subr.bf16.mxu0 0
        %371 = vmatpush1.bf16.msra.mxu0 0
        %372 = vmatprep.subr.bf16.mxu0 0
        %373 = vmatpush1.bf16.msra.mxu0 0
        %374 = vmatprep.subr.bf16.mxu0 0
        %375 = vmatpush1.bf16.msra.mxu0 0
        %376 = vmatprep.subr.bf16.mxu0 0
        %377 = vmatpush1.bf16.msra.mxu0 0
        %378 = vmatprep.subr.bf16.mxu0 0
        %379 = vmatpush1.bf16.msra.mxu0 0
        %380 = vmatprep.subr.bf16.mxu0 0
        %381 = vmatpush1.bf16.msra.mxu0 0
        %382 = vmatprep.mubr.bf16.mxu0 0
        %383 = vmatmul.mubr.bf16.gmra.mrb[0].mxu0 %v348
        %v384 = vpop.f32.mrb[0].mxu0
        %v385 = vadd.f32 0.0, %v384
        %v386 = vpop.f32.mrb[0].mxu0
        %v387 = vpop.f32.mrb[0].mxu0
        %v388 = vpop.f32.mrb[0].mxu0
        %389 = vdwg.mxu0
        %v390 = vld [vmem:[%s323] sm:$0xff]
        %v391 = vld [vmem:[%s327] sm:$0xff]
        %v392 = vmul.f32 %v385, %v390
        %394 = vrot.lane.b32.xlu0 %v391, 4
        %v395 = vpop.permute.xlu0 %394
        %v397 = vmul.f32 %v385, %v395
        %399 = vrot.lane.b32.xlu0 %v397, 124
        %v400 = vpop.permute.xlu0 %399
        %v402 = vsub.f32 %v392, %v400
        %v403 = vpack.c.bf16 %v402, %v402
        %vm404 = vcmask 27648
        %405 = vst.msk [vmem:[%s298] sm:$0xf] %vm404, %v403
        %v406 = vmul.f32 %v385, %v391
        %408 = vrot.lane.b32.xlu0 %v390, 4
        %v409 = vpop.permute.xlu0 %408
        %v411 = vmul.f32 %v385, %v409
        %413 = vrot.lane.b32.xlu0 %v411, 124
        %v414 = vpop.permute.xlu0 %413
        %v416 = vadd.f32 %v406, %v414
        %v417 = vpack.c.bf16 %v416, %v416
        %v419 = vunpack.c.l.b16 %v417
        %v420 = vpack.c.b16 %v419, %v419
        %421 = vrot.lane.b32.xlu0 %v420, 4
        %v422 = vpop.permute.xlu0 %421
        %vm424 = vcmask 60448
        %425 = vst.msk [vmem:[%s298] sm:$0xf] %vm424, %v422
        %426 = vrot.lane.b32.xlu0 %v390, 8
        %v427 = vpop.permute.xlu0 %426
        %v429 = vmul.f32 %v385, %v427
        %430 = vrot.lane.b32.xlu0 %v391, 12
        %v431 = vpop.permute.xlu0 %430
        %v433 = vmul.f32 %v385, %v431
        %435 = vrot.lane.b32.xlu0 %v433, 124
        %v436 = vpop.permute.xlu0 %435
        %v438 = vsub.f32 %v429, %v436
        %v439 = vpack.c.bf16 %v438, %v438
        %v441 = vunpack.c.l.b16 %v439
        %v442 = vpack.c.b16 %v441, %v441
        %443 = vrot.lane.b32.xlu0 %v442, 120
        %v444 = vpop.permute.xlu0 %443
        %s446 = scalar_lea.vmem %s298, 4 [#allocation2]
        %447 = vst.msk [vmem:[%s446] sm:$0xf] %vm404, %v444
        %448 = vrot.lane.b32.xlu0 %v391, 8
        %v449 = vpop.permute.xlu0 %448
        %v451 = vmul.f32 %v385, %v449
        %452 = vrot.lane.b32.xlu0 %v390, 12
        %v453 = vpop.permute.xlu0 %452
        %v455 = vmul.f32 %v385, %v453
        %457 = vrot.lane.b32.xlu0 %v455, 124
        %v458 = vpop.permute.xlu0 %457
        %v460 = vadd.f32 %v451, %v458
        %v461 = vpack.c.bf16 %v460, %v460
        %v463 = vunpack.c.l.b16 %v461
        %v464 = vpack.c.b16 %v463, %v463
        %465 = vrot.lane.b32.xlu0 %v464, 124
        %v466 = vpop.permute.xlu0 %465
        %468 = vst.msk [vmem:[%s446] sm:$0xf] %vm424, %v466
        %469 = vrot.lane.b32.xlu0 %v390, 16
        %v470 = vpop.permute.xlu0 %469
        %v472 = vmul.f32 %v385, %v470
        %473 = vrot.lane.b32.xlu0 %v391, 20
        %v474 = vpop.permute.xlu0 %473
        %v476 = vmul.f32 %v385, %v474
        %478 = vrot.lane.b32.xlu0 %v476, 124
        %v479 = vpop.permute.xlu0 %478
        %v481 = vsub.f32 %v472, %v479
        %v482 = vpack.c.bf16 %v481, %v481
        %v484 = vunpack.c.l.b16 %v482
        %v485 = vpack.c.b16 %v484, %v484
        %486 = vrot.lane.b32.xlu0 %v485, 112
        %v487 = vpop.permute.xlu0 %486
        %s489 = scalar_lea.vmem %s298, 8 [#allocation2]
        %490 = vst.msk [vmem:[%s489] sm:$0xf] %vm404, %v487
        %491 = vrot.lane.b32.xlu0 %v391, 16
        %v492 = vpop.permute.xlu0 %491
        %v494 = vmul.f32 %v385, %v492
        %495 = vrot.lane.b32.xlu0 %v390, 20
        %v496 = vpop.permute.xlu0 %495
        %v498 = vmul.f32 %v385, %v496
        %500 = vrot.lane.b32.xlu0 %v498, 124
        %v501 = vpop.permute.xlu0 %500
        %v503 = vadd.f32 %v494, %v501
        %v504 = vpack.c.bf16 %v503, %v503
        %v506 = vunpack.c.l.b16 %v504
        %v507 = vpack.c.b16 %v506, %v506
        %508 = vrot.lane.b32.xlu0 %v507, 116
        %v509 = vpop.permute.xlu0 %508
        %511 = vst.msk [vmem:[%s489] sm:$0xf] %vm424, %v509
        %512 = vrot.lane.b32.xlu0 %v390, 24
        %v513 = vpop.permute.xlu0 %512
        %v515 = vmul.f32 %v385, %v513
        %516 = vrot.lane.b32.xlu0 %v391, 28
        %v517 = vpop.permute.xlu0 %516
        %v519 = vmul.f32 %v385, %v517
        %521 = vrot.lane.b32.xlu0 %v519, 124
        %v522 = vpop.permute.xlu0 %521
        %v524 = vsub.f32 %v515, %v522
        %v525 = vpack.c.bf16 %v524, %v524
        %v527 = vunpack.c.l.b16 %v525
        %v528 = vpack.c.b16 %v527, %v527
        %529 = vrot.lane.b32.xlu0 %v528, 104
        %v530 = vpop.permute.xlu0 %529
        %s532 = scalar_lea.vmem %s298, 12 [#allocation2]
        %533 = vst.msk [vmem:[%s532] sm:$0xf] %vm404, %v530
        %534 = vrot.lane.b32.xlu0 %v391, 24
        %v535 = vpop.permute.xlu0 %534
        %v537 = vmul.f32 %v385, %v535
        %538 = vrot.lane.b32.xlu0 %v390, 28
        %v539 = vpop.permute.xlu0 %538
        %v541 = vmul.f32 %v385, %v539
        %543 = vrot.lane.b32.xlu0 %v541, 124
        %v544 = vpop.permute.xlu0 %543
        %v546 = vadd.f32 %v537, %v544
        %v547 = vpack.c.bf16 %v546, %v546
        %v549 = vunpack.c.l.b16 %v547
        %v550 = vpack.c.b16 %v549, %v549
        %551 = vrot.lane.b32.xlu0 %v550, 108
        %v552 = vpop.permute.xlu0 %551
        %554 = vst.msk [vmem:[%s532] sm:$0xf] %vm424, %v552
        %555 = vrot.lane.b32.xlu0 %v390, 32
        %v556 = vpop.permute.xlu0 %555
        %v558 = vmul.f32 %v385, %v556
        %559 = vrot.lane.b32.xlu0 %v391, 36
        %v560 = vpop.permute.xlu0 %559
        %v562 = vmul.f32 %v385, %v560
        %564 = vrot.lane.b32.xlu0 %v562, 124
        %v565 = vpop.permute.xlu0 %564
        %v567 = vsub.f32 %v558, %v565
        %v568 = vpack.c.bf16 %v567, %v567
        %v570 = vunpack.c.l.b16 %v568
        %v571 = vpack.c.b16 %v570, %v570
        %572 = vrot.lane.b32.xlu0 %v571, 96
        %v573 = vpop.permute.xlu0 %572
        %575 = vst.msk [vmem:[%s305] sm:$0xf] %vm404, %v573
        %576 = vrot.lane.b32.xlu0 %v391, 32
        %v577 = vpop.permute.xlu0 %576
        %v579 = vmul.f32 %v385, %v577
        %580 = vrot.lane.b32.xlu0 %v390, 36
        %v581 = vpop.permute.xlu0 %580
        %v583 = vmul.f32 %v385, %v581
        %585 = vrot.lane.b32.xlu0 %v583, 124
        %v586 = vpop.permute.xlu0 %585
        %v588 = vadd.f32 %v579, %v586
        %v589 = vpack.c.bf16 %v588, %v588
        %v591 = vunpack.c.l.b16 %v589
        %v592 = vpack.c.b16 %v591, %v591
        %593 = vrot.lane.b32.xlu0 %v592, 100
        %v594 = vpop.permute.xlu0 %593
        %596 = vst.msk [vmem:[%s305] sm:$0xf] %vm424, %v594
        %v597 = vpack.c.bf16 %v385, %v385
        %v599 = vunpack.c.l.b16 %v597
        %v600 = vpack.c.b16 %v599, %v599
        %601 = vrot.lane.b32.xlu0 %v600, 80
        %v602 = vpop.permute.xlu0 %601
        %vm604 = vcmask 60416
        %605 = vst.msk [vmem:[%s312] sm:$0xf] %vm604, %v602
        %606 = vrot.lane.b32.xlu0 %v390, 40
        %v607 = vpop.permute.xlu0 %606
        %v609 = vmul.f32 %v385, %v607
        %610 = vrot.lane.b32.xlu0 %v391, 44
        %v611 = vpop.permute.xlu0 %610
        %v613 = vmul.f32 %v385, %v611
        %615 = vrot.lane.b32.xlu0 %v613, 124
        %v616 = vpop.permute.xlu0 %615
        %v618 = vsub.f32 %v609, %v616
        %v619 = vpack.c.bf16 %v618, %v618
        %v621 = vunpack.c.l.b16 %v619
        %v622 = vpack.c.b16 %v621, %v621
        %623 = vrot.lane.b32.xlu0 %v622, 88
        %v624 = vpop.permute.xlu0 %623
        %s626 = scalar_lea.vmem %s305, 4 [#allocation4]
        %627 = vst.msk [vmem:[%s626] sm:$0xf] %vm404, %v624
        %628 = vrot.lane.b32.xlu0 %v391, 40
        %v629 = vpop.permute.xlu0 %628
        %v631 = vmul.f32 %v385, %v629
        %632 = vrot.lane.b32.xlu0 %v390, 44
        %v633 = vpop.permute.xlu0 %632
        %v635 = vmul.f32 %v385, %v633
        %637 = vrot.lane.b32.xlu0 %v635, 124
        %v638 = vpop.permute.xlu0 %637
        %v640 = vadd.f32 %v631, %v638
        %v641 = vpack.c.bf16 %v640, %v640
        %v643 = vunpack.c.l.b16 %v641
        %v644 = vpack.c.b16 %v643, %v643
        %645 = vrot.lane.b32.xlu0 %v644, 92
        %v646 = vpop.permute.xlu0 %645
        %648 = vst.msk [vmem:[%s626] sm:$0xf] %vm424, %v646
        %649 = vrot.lane.b32.xlu0 %v600, 72
        %v650 = vpop.permute.xlu0 %649
        %s652 = scalar_lea.vmem %s312, 4 [#allocation6]
        %653 = vst.msk [vmem:[%s652] sm:$0xf] %vm604, %v650
        %s654 = sand.u32 %s147, 1
        %s655 = scalar_lea.sflag [#allocation3], %s654
        %s656 = sand.u32 %s147, 1
        %s657 = smul.addr %s656, 16
        %s658 = scalar_lea.vmem [#allocation2], %s657
        %s659 = sand.u32 %s24, 1
        %s660 = scalar_lea.sflag [#allocation5], %s659
        %s661 = sand.u32 %s175, 1
        %s662 = smul.addr %s661, 8
        %s663 = scalar_lea.vmem [#allocation4], %s662
        %s664 = sand.u32 %s24, 1
        %s665 = scalar_lea.sflag [#allocation5], %s664
        %s666 = sand.u32 %s203, 1
        %s667 = smul.addr %s666, 8
        %s668 = scalar_lea.vmem [#allocation6], %s667
        // Predicated region
        $region37: #{tpu_custom_call.1} parent=35 // pred_check
          %p669 = pneg %p157
        $region38: #{tpu_custom_call.1} parent=35 // pred_check_branch
          %671 = sbr.rel (%p669) target = $region40
        $region39: #{tpu_custom_call.1} parent=35 // pred_region
          %s673 = ssub.s32 256, 256
          %674 = vsyncadd %s655, %s673
          %s675 = smul.addr %s28, 4
          %s676 = sadd.s32 %s29, %s675
          %s677 = smul.addr %s676, 64
          %s678 = scalar_lea.hbm %s4, %s677
          %s679 = sshll.u32 %s658, 4
          %s680 = int_to_ptr.vmem [resolvable:$true] %s679
          %685 = dma.vmem_to_hbm [thread:$0]  %s680, 256, %s678, %s655, 64, 64, 4
        $region40: #{tpu_custom_call.1} parent=35 // pred_fallthru
          _
        // Predicated region
        $region41: #{tpu_custom_call.1} parent=35 // pred_check
          %p686 = pneg %p185
        $region42: #{tpu_custom_call.1} parent=35 // pred_check_branch
          %688 = sbr.rel (%p686) target = $region44
        $region43: #{tpu_custom_call.1} parent=35 // pred_region
          %s690 = ssub.s32 128, 128
          %691 = vsyncadd %s660, %s690
          %s692 = smul.addr %s28, 2
          %s693 = sadd.s32 %s29, %s692
          %s694 = smul.addr %s693, 64
          %s695 = scalar_lea.hbm %s5, %s694
          %s696 = sshll.u32 %s663, 4
          %s697 = int_to_ptr.vmem [resolvable:$true] %s696
          %702 = dma.vmem_to_hbm [thread:$0]  %s697, 128, %s695, %s660, 64, 64, 4
        $region44: #{tpu_custom_call.1} parent=35 // pred_fallthru
          _
        // Predicated region
        $region45: #{tpu_custom_call.1} parent=35 // pred_check
          %p703 = pneg %p213
        $region46: #{tpu_custom_call.1} parent=35 // pred_check_branch
          %705 = sbr.rel (%p703) target = $region48
        $region47: #{tpu_custom_call.1} parent=35 // pred_region
          %s707 = ssub.s32 128, 128
          %708 = vsyncadd %s665, %s707
          %s709 = smul.addr %s28, 2
          %s710 = sadd.s32 %s29, %s709
          %s711 = smul.addr %s710, 64
          %s712 = scalar_lea.hbm %s6, %s711
          %s713 = sshll.u32 %s668, 4
          %s714 = int_to_ptr.vmem [resolvable:$true] %s713
          %719 = dma.vmem_to_hbm [thread:$0]  %s714, 128, %s712, %s665, 64, 64, 4
        $region48: #{tpu_custom_call.1} parent=35 // pred_fallthru
          _
      $region36: #{tpu_custom_call.1} parent=5 // pred_fallthru
        _
      %p720 = scmp.le.s32.totalorder 2, %s19
      // Predicated region
      $region49: #{tpu_custom_call.1} parent=5 // pred_check
        %p721 = pneg %p720
      $region50: #{tpu_custom_call.1} parent=5 // pred_check_branch
        %723 = sbr.rel (%p721) target = $region52
      $region51: #{tpu_custom_call.1} parent=5 // pred_region
        %s724 = ssub.s32 %s19, 2
        // Predicated region
        $region53: #{tpu_custom_call.1} parent=51 // pred_check
          %p725 = pneg %p163
        $region54: #{tpu_custom_call.1} parent=51 // pred_check_branch
          %727 = sbr.rel (%p725) target = $region56
        $region55: #{tpu_custom_call.1} parent=51 // pred_region
          %s728 = sand.u32 %s148, 1
          %s729 = scalar_lea.sflag [#allocation3], %s728
          %s730 = sand.u32 %s148, 1
          %s731 = smul.addr %s730, 16
          %s732 = scalar_lea.vmem [#allocation2], %s731
          %733 = dma.done %s729, 256
        $region56: #{tpu_custom_call.1} parent=51 // pred_fallthru
          _
        // Predicated region
        $region57: #{tpu_custom_call.1} parent=51 // pred_check
          %p734 = pneg %p191
        $region58: #{tpu_custom_call.1} parent=51 // pred_check_branch
          %736 = sbr.rel (%p734) target = $region60
        $region59: #{tpu_custom_call.1} parent=51 // pred_region
          %s737 = sand.u32 %s25, 1
          %s738 = scalar_lea.sflag [#allocation5], %s737
          %s739 = sand.u32 %s176, 1
          %s740 = smul.addr %s739, 8
          %s741 = scalar_lea.vmem [#allocation4], %s740
          %742 = dma.done %s738, 128
        $region60: #{tpu_custom_call.1} parent=51 // pred_fallthru
          _
        // Predicated region
        $region61: #{tpu_custom_call.1} parent=51 // pred_check
          %p743 = pneg %p219
        $region62: #{tpu_custom_call.1} parent=51 // pred_check_branch
          %745 = sbr.rel (%p743) target = $region64
        $region63: #{tpu_custom_call.1} parent=51 // pred_region
          %s746 = sand.u32 %s25, 1
          %s747 = scalar_lea.sflag [#allocation5], %s746
          %s748 = sand.u32 %s204, 1
          %s749 = smul.addr %s748, 8
          %s750 = scalar_lea.vmem [#allocation6], %s749
          %751 = dma.done %s747, 128
        $region64: #{tpu_custom_call.1} parent=51 // pred_fallthru
          _
      $region52: #{tpu_custom_call.1} parent=5 // pred_fallthru
        _
    $region6: #{tpu_custom_call.1} parent=1 // loop_footer
      %s23 = sadd.s32 1, %s19
    $region7: #{tpu_custom_call.1} parent=1 // loop_footer_branch
      %18 = sbr.rel target = $region3
    $region8: #{tpu_custom_call.1} parent=1 // loop_exit
      _
    %752 = vsyncpa [#allocation3], 1
    %s753 = scalar_lea.sflag [#allocation3], 1
    %754 = vsyncpa %s753, 1
    %755 = vsyncpa [#allocation5], 1
    %s756 = scalar_lea.sflag [#allocation5], 1
    %757 = vsyncpa %s756, 1

</llo_original>
